<compile_context>
chip_gen: v5e
topology: v5e:2x2
jax: 0.10.0
libtpu: 0.0.40
codegen_flags: <defaults>
</compile_context>

<pallas_src>
import functools

import jax
import jax.numpy as jnp
from jax.experimental import pallas as pl
from jax.experimental.pallas import tpu as pltpu


def mynet_kernel(x_ref, w_ref, b_ref, o_ref):
    # x_ref: [TILE_B, D] bf16, w_ref: [D, C_pad] bf16, b_ref: [1, C_pad] f32, o_ref: [TILE_B, C_pad] f32
    logits = jnp.dot(x_ref[...], w_ref[...],
                     preferred_element_type=jnp.float32) + b_ref[...]
    # Numerically-stable softmax along the (padded, lane-dense) class axis — all in f32.
    m = jnp.max(logits, axis=-1, keepdims=True)
    e = jnp.exp(logits - m)
    denom = jnp.sum(e, axis=-1, keepdims=True)
    # Exact divide: rows must sum to 1 within f32 rounding (approx reciprocal was too coarse).
    o_ref[...] = (e / denom).astype(o_ref.dtype)


def _round_up(n, m):
    return ((n + m - 1) // m) * m


@functools.partial(jax.jit, static_argnames=("tile_b",))
def mynet_forward(x, w, b, *, tile_b=128):
    """x: [B, 512] f32, w: [C, 512] f32 (torch Linear layout), b: [C] f32 -> softmax probs [B, C] f32."""
    B, D = x.shape
    C = w.shape[0]

    # --- pad class axis to a lane-dense multiple of 128 ---
    C_pad = _round_up(max(C, 128), 128)
    w_t = jnp.transpose(w)                                   # [D, C]
    w_t_pad = jnp.zeros((D, C_pad), jnp.bfloat16).at[:, :C].set(w_t.astype(jnp.bfloat16))
    # Padded classes get a huge negative bias so exp() underflows to 0 -> no probability leakage.
    b_pad = jnp.full((1, C_pad), -1e30, jnp.float32).at[0, :C].set(b.astype(jnp.float32))

    # --- tile / pad batch axis ---
    tile_b = min(tile_b, _round_up(B, 8))
    B_pad = _round_up(B, tile_b)
    x_bf = x.astype(jnp.bfloat16)
    if B_pad != B:
        x_bf = jnp.zeros((B_pad, D), jnp.bfloat16).at[:B, :].set(x_bf)

    out = pl.pallas_call(
        mynet_kernel,
        out_shape=jax.ShapeDtypeStruct((B_pad, C_pad), jnp.float32),
        grid=(B_pad // tile_b,),
        in_specs=[
            pl.BlockSpec((tile_b, D), lambda i: (i, 0)),      # x tile streams with the grid
            pl.BlockSpec((D, C_pad), lambda i: (0, 0)),       # weight resident across steps
            pl.BlockSpec((1, C_pad), lambda i: (0, 0)),       # bias resident across steps
        ],
        out_specs=pl.BlockSpec((tile_b, C_pad), lambda i: (i, 0)),
        compiler_params=pltpu.CompilerParams(
            dimension_semantics=("parallel",)),               # batch tiles are independent
    )(x_bf, w_t_pad, b_pad)

    return out[:B, :C]


if __name__ == "__main__":
    num_classes = 10
    in_features = 512
    batch = 256            # small, but enough rows to exercise batch tiling (grid of 2 at TILE_B=128)

    key = jax.random.PRNGKey(0)
    kx, kw, kb = jax.random.split(key, 3)

    # Deterministic parameter init (mimics torch Linear default: U(-1/sqrt(fan_in), 1/sqrt(fan_in))).
    bound = 1.0 / jnp.sqrt(jnp.float32(in_features))
    w = jax.random.uniform(kw, (num_classes, in_features), jnp.float32, -bound, bound)  # [out, in]
    b = jax.random.uniform(kb, (num_classes,), jnp.float32, -bound, bound)

    x = jax.random.normal(kx, (batch, in_features), jnp.float32)

    out = mynet_forward(x, w, b)
    out = jax.block_until_ready(out)

    # Sanity checks against plain JAX references.
    assert out.shape == (batch, num_classes)
    # (a) reference with the same bf16 operand cast (isolates any softmax/normalization error)
    ref_bf = jax.nn.softmax(
        x.astype(jnp.bfloat16).astype(jnp.float32)
        @ jnp.transpose(w).astype(jnp.bfloat16).astype(jnp.float32)
        + b[None, :], axis=1)
    assert jnp.allclose(out, ref_bf, atol=5e-3, rtol=0), "mismatch vs bf16-operand reference"
    # (b) full-f32 module reference (loose tolerance accounts for bf16 matmul operands)
    ref_f32 = jax.nn.softmax(x @ jnp.transpose(w) + b[None, :], axis=1)
    assert jnp.allclose(out, ref_f32, atol=2e-2, rtol=0), "mismatch vs f32 reference"
    # (c) rows are valid probability distributions (exact divide -> f32-rounding tight)
    assert jnp.allclose(jnp.sum(out, axis=1), 1.0, atol=1e-3)

    print("KERNEL_OK")
</pallas_src>

<mosaic_0001>
module attributes {stable_mosaic.version = 11 : i64} {
  func.func @mynet_kernel(%arg0: i32, %arg1: memref<128x512xbf16, #tpu.memory_space<vmem>>, %arg2: memref<512x128xbf16, #tpu.memory_space<vmem>>, %arg3: memref<1x128xf32, #tpu.memory_space<vmem>>, %arg4: memref<128x128xf32, #tpu.memory_space<vmem>>) attributes {dimension_semantics = [#tpu.dimension_semantics<parallel>], iteration_bounds = array<i64: 2>, scalar_prefetch = 0 : i64, scratch_operands = 0 : i64, tpu.core_type = #tpu.core_type<tc>, window_params = [{transform_indices = @transform_0, window_bounds = array<i64: 128, 512>}, {pipeline_mode = #tpu.pipeline_mode<synchronous>, transform_indices = @transform_1, window_bounds = array<i64: 512, 128>}, {pipeline_mode = #tpu.pipeline_mode<synchronous>, transform_indices = @transform_2, window_bounds = array<i64: 1, 128>}, {transform_indices = @transform_3, window_bounds = array<i64: 128, 128>}]} {
    %c0 = arith.constant 0 : index
    %c0_0 = arith.constant 0 : index
    %0 = vector.load %arg1[%c0, %c0_0] : memref<128x512xbf16, #tpu.memory_space<vmem>>, vector<128x512xbf16>
    %c0_1 = arith.constant 0 : index
    %c0_2 = arith.constant 0 : index
    %1 = vector.load %arg2[%c0_1, %c0_2] : memref<512x128xbf16, #tpu.memory_space<vmem>>, vector<512x128xbf16>
    %cst = arith.constant dense<0.000000e+00> : vector<128x128xf32>
    %2 = tpu.matmul %0, %1, %cst {dimension_numbers = #tpu.dot_dimension_numbers<[1], [0], [0], [1], [0, 0, 1, 1], [], []>} : vector<128x512xbf16>, vector<512x128xbf16>, vector<128x128xf32> -> vector<128x128xf32>
    %c0_3 = arith.constant 0 : index
    %c0_4 = arith.constant 0 : index
    %3 = vector.load %arg3[%c0_3, %c0_4] : memref<1x128xf32, #tpu.memory_space<vmem>>, vector<1x128xf32>
    %4 = vector.broadcast %3 : vector<1x128xf32> to vector<128x128xf32>
    %5 = arith.addf %2, %4 : vector<128x128xf32>
    %cst_5 = arith.constant dense<0xFF800000> : vector<128xf32>
    %6 = vector.multi_reduction <maximumf>, %5, %cst_5 [1] : vector<128x128xf32> to vector<128xf32>
    %7 = vector.shape_cast %6 : vector<128xf32> to vector<128x1xf32>
    %8 = vector.broadcast %7 : vector<128x1xf32> to vector<128x128xf32>
    %9 = arith.subf %5, %8 : vector<128x128xf32>
    %10 = math.exp %9 : vector<128x128xf32>
    %cst_6 = arith.constant dense<0.000000e+00> : vector<128xf32>
    %11 = vector.multi_reduction <add>, %10, %cst_6 [1] : vector<128x128xf32> to vector<128xf32>
    %12 = vector.shape_cast %11 : vector<128xf32> to vector<128x1xf32>
    %13 = vector.broadcast %12 : vector<128x1xf32> to vector<128x128xf32>
    %14 = arith.divf %10, %13 : vector<128x128xf32>
    %c0_7 = arith.constant 0 : index
    %c0_8 = arith.constant 0 : index
    %15 = vector.load %arg4[%c0_7, %c0_8] : memref<128x128xf32, #tpu.memory_space<vmem>>, vector<128x128xf32>
    tpu.vector_store %arg4[%c0_7, %c0_8], %14 {strides = array<i32>} : memref<128x128xf32, #tpu.memory_space<vmem>>, vector<128x128xf32>,
    return
  }
  func.func @transform_0(%arg0: i32) -> (i32, i32) {
    %c0_i32 = arith.constant 0 : i32
    %c0_i32_0 = arith.constant 0 : i32
    return %arg0, %c0_i32 : i32, i32
  }
  func.func @transform_1(%arg0: i32) -> (i32, i32) {
    %c0_i32 = arith.constant 0 : i32
    %c0_i32_0 = arith.constant 0 : i32
    %c0_i32_1 = arith.constant 0 : i32
    return %c0_i32, %c0_i32_0 : i32, i32
  }
  func.func @transform_2(%arg0: i32) -> (i32, i32) {
    %c0_i32 = arith.constant 0 : i32
    %c0_i32_0 = arith.constant 0 : i32
    %c0_i32_1 = arith.constant 0 : i32
    return %c0_i32, %c0_i32_0 : i32, i32
  }
  func.func @transform_3(%arg0: i32) -> (i32, i32) {
    %c0_i32 = arith.constant 0 : i32
    %c0_i32_0 = arith.constant 0 : i32
    return %arg0, %c0_i32 : i32, i32
  }
}

</mosaic_0001>

<llo_original>
// kernel: mynet_forward.1
$region0: #{mynet_forward.1}
  #allocation0 [shape = 'u32[]', space=smem, size = 0x4, offset = 0x4, fixed_abs, tag = 'smem constant byte address 0x4 - core index']
  #allocation1 [shape = 'u32[72,128]{1,0:T(1,128)}', space=vmem, size = 0x9000, scoped, tag = 'internal scratch']
  %s0 = inlined_call_operand.vmem [shape: bf16[256,512], index: 0, kind: input, shape index: {}]
  %s1 = inlined_call_operand.vmem [shape: bf16[512,128], index: 1, kind: input, shape index: {}]
  %s2 = inlined_call_operand.vmem [shape: f32[1,128], index: 2, kind: input, shape index: {}]
  %s3 = inlined_call_operand.vmem [shape: f32[256,128], index: 3, kind: output, shape index: {}]
  %s4 = sld [smem:[#allocation0]]
  $region45: #{mynet_forward.1} parent=0
    _
  %s6 = ssub.s32 1, %s4
  %s7 = scalar_select 0, %s6, %s4
  loop: start=0, step=1, limit=4
  $region2: #{mynet_forward.1} parent=0 // loop_pre_header
    _
  $region3: #{mynet_forward.1} parent=0 // loop_header
    %s9 = sphi 0, %s13
    %p10 = scmp.ge.s32.totalorder %s9, 4
    %s19 = sphi 0, %s21
    %s22 = sphi 0, %s19
    %s23 = sphi 0, %s22
    %s39 = sphi 0, %s23
    %s43 = sphi 0, %s43
    %s45 = sphi 0, %s43
    %s46 = sphi 0, %s45
    %s60 = sphi 0, %s46
    %s64 = sphi 0, %s64
    %s66 = sphi 0, %s64
    %s67 = sphi 0, %s66
    %s81 = sphi 0, %s67
    %s87 = sphi 0, %s89
    %s90 = sphi 0, %s87
    %s91 = sphi 0, %s90
    %s107 = sphi 0, %s91
  $region4: #{mynet_forward.1} parent=0 // loop_header_branch
    %12 = sbr.rel (%p10) target = $region8
  $region5: #{mynet_forward.1} parent=0 // loop_body
    %s14 = ssub.s32 %s9, 1
    %s15 = ssub.s32 %s9, 2
    %s16 = sadd.s32 %s9, 1
    %s17 = ssub.s32 %s9, %s16
    %p18 = scmp.eq.s32.totalorder %s17, 0
    %s20 = sadd.s32 %s19, 1
    %s21 = scalar_select %p18, %s19, %s20
    %p24 = pneg %p18
    %p25 = scmp.eq.s32.totalorder %s9, 1
    %p26 = por %p24, %p25
    %p27 = scmp.ne.s32.totalorder %s19, %s22
    %p28 = scmp.eq.s32.totalorder %s9, 0
    %p29 = por %p27, %p28
    %p30 = scmp.ne.s32.totalorder %s19, %s22
    %p31 = scmp.eq.s32.totalorder %s14, 1
    %p32 = por %p30, %p31
    %p33 = scmp.ne.s32.totalorder %s22, %s23
    %p34 = scmp.eq.s32.totalorder %s14, 0
    %p35 = por %p33, %p34
    %p36 = scmp.ne.s32.totalorder %s22, %s23
    %p37 = scmp.eq.s32.totalorder %s15, 1
    %p38 = por %p36, %p37
    %p40 = scmp.ne.s32.totalorder %s23, %s39
    %p41 = scmp.eq.s32.totalorder %s15, 0
    %p42 = por %p40, %p41
    %s44 = sadd.s32 %s43, 1
    %p47 = scmp.eq.s32.totalorder %s9, 1
    %p48 = scmp.ne.s32.totalorder %s43, %s45
    %p49 = scmp.eq.s32.totalorder %s9, 0
    %p50 = por %p48, %p49
    %p51 = scmp.ne.s32.totalorder %s43, %s45
    %p52 = scmp.eq.s32.totalorder %s14, 1
    %p53 = por %p51, %p52
    %p54 = scmp.ne.s32.totalorder %s45, %s46
    %p55 = scmp.eq.s32.totalorder %s14, 0
    %p56 = por %p54, %p55
    %p57 = scmp.ne.s32.totalorder %s45, %s46
    %p58 = scmp.eq.s32.totalorder %s15, 1
    %p59 = por %p57, %p58
    %p61 = scmp.ne.s32.totalorder %s46, %s60
    %p62 = scmp.eq.s32.totalorder %s15, 0
    %p63 = por %p61, %p62
    %s65 = sadd.s32 %s64, 1
    %p68 = scmp.eq.s32.totalorder %s9, 1
    %p69 = scmp.ne.s32.totalorder %s64, %s66
    %p70 = scmp.eq.s32.totalorder %s9, 0
    %p71 = por %p69, %p70
    %p72 = scmp.ne.s32.totalorder %s64, %s66
    %p73 = scmp.eq.s32.totalorder %s14, 1
    %p74 = por %p72, %p73
    %p75 = scmp.ne.s32.totalorder %s66, %s67
    %p76 = scmp.eq.s32.totalorder %s14, 0
    %p77 = por %p75, %p76
    %p78 = scmp.ne.s32.totalorder %s66, %s67
    %p79 = scmp.eq.s32.totalorder %s15, 1
    %p80 = por %p78, %p79
    %p82 = scmp.ne.s32.totalorder %s67, %s81
    %p83 = scmp.eq.s32.totalorder %s15, 0
    %p84 = por %p82, %p83
    %s85 = ssub.s32 %s9, %s16
    %p86 = scmp.eq.s32.totalorder %s85, 0
    %s88 = sadd.s32 %s87, 1
    %s89 = scalar_select %p86, %s87, %s88
    %p92 = pneg %p86
    %p93 = scmp.eq.s32.totalorder %s9, 1
    %p94 = por %p92, %p93
    %p95 = scmp.ne.s32.totalorder %s87, %s90
    %p96 = scmp.eq.s32.totalorder %s9, 0
    %p97 = por %p95, %p96
    %p98 = scmp.ne.s32.totalorder %s87, %s90
    %p99 = scmp.eq.s32.totalorder %s14, 1
    %p100 = por %p98, %p99
    %p101 = scmp.ne.s32.totalorder %s90, %s91
    %p102 = scmp.eq.s32.totalorder %s14, 0
    %p103 = por %p101, %p102
    %p104 = scmp.ne.s32.totalorder %s90, %s91
    %p105 = scmp.eq.s32.totalorder %s15, 1
    %p106 = por %p104, %p105
    %p108 = scmp.ne.s32.totalorder %s91, %s107
    %p109 = scmp.eq.s32.totalorder %s15, 0
    %p110 = por %p108, %p109
    %p111 = scmp.le.s32.totalorder 1, %s9
    %p112 = scmp.lt.s32.totalorder %s9, 3
    %p113 = pnand %p111, %p112
    %p114 = pneg %p113
    // Predicated region
    $region9: #{mynet_forward.1} parent=5 // pred_check
      _
    $region10: #{mynet_forward.1} parent=5 // pred_check_branch
      %116 = sbr.rel (%p113) target = $region12
    $region11: #{mynet_forward.1} parent=5 // pred_region
      %s117 = ssub.s32 %s9, 1
      // Predicated region
      $region13: #{mynet_forward.1} parent=11 // pred_check
        %p118 = pneg %p56
      $region14: #{mynet_forward.1} parent=11 // pred_check_branch
        %120 = sbr.rel (%p118) target = $region16
      $region15: #{mynet_forward.1} parent=11 // pred_region
        _
      $region16: #{mynet_forward.1} parent=11 // pred_fallthru
        _
      // Predicated region
      $region17: #{mynet_forward.1} parent=11 // pred_check
        %p121 = pneg %p77
      $region18: #{mynet_forward.1} parent=11 // pred_check_branch
        %123 = sbr.rel (%p121) target = $region20
      $region19: #{mynet_forward.1} parent=11 // pred_region
        _
      $region20: #{mynet_forward.1} parent=11 // pred_fallthru
        _
    $region12: #{mynet_forward.1} parent=5 // pred_fallthru
      _
    %p124 = scmp.lt.s32.totalorder %s9, 2
    // Predicated region
    $region21: #{mynet_forward.1} parent=5 // pred_check
      %p125 = pneg %p124
    $region22: #{mynet_forward.1} parent=5 // pred_check_branch
      %127 = sbr.rel (%p125) target = $region24
    $region23: #{mynet_forward.1} parent=5 // pred_region
      // Predicated region
      $region25: #{mynet_forward.1} parent=23 // pred_check
        %p128 = pneg %p29
      $region26: #{mynet_forward.1} parent=23 // pred_check_branch
        %130 = sbr.rel (%p128) target = $region28
      $region27: #{mynet_forward.1} parent=23 // pred_region
        %s131 = smul.u32 16, %s9
        %p132 = scmp.lt.s32.totalorder %s131, 31
        %s133 = scalar_select %p132, %s131, 31
        %s134 = smul.addr %s133, 4
        %s135 = smul.addr %s134, 4
        %s136 = scalar_lea.vmem %s0, %s135
        %s137 = smul.u32 16, %s9
      $region28: #{mynet_forward.1} parent=23 // pred_fallthru
        _
    $region24: #{mynet_forward.1} parent=5 // pred_fallthru
      _
    %p138 = scmp.le.s32.totalorder 1, %s9
    %p139 = scmp.lt.s32.totalorder %s9, 3
    %p140 = pnand %p138, %p139
    %p141 = pneg %p140
    // Predicated region
    $region29: #{mynet_forward.1} parent=5 // pred_check
      _
    $region30: #{mynet_forward.1} parent=5 // pred_check_branch
      %143 = sbr.rel (%p140) target = $region32
    $region31: #{mynet_forward.1} parent=5 // pred_region
      %s144 = ssub.s32 %s9, 1
      %s145 = smul.u32 16, %s14
      %p146 = scmp.lt.s32.totalorder %s145, 31
      %s147 = scalar_select %p146, %s145, 31
      %s148 = smul.addr %s147, 4
      %s149 = smul.addr %s148, 4
      %s150 = scalar_lea.vmem %s0, %s149
      %p151 = pneg %p35
      %p152 = pneg %p32
      %p153 = pneg %p56
      %p154 = pneg %p53
      %p155 = pneg %p77
      %p156 = pneg %p74
      %p157 = pneg %p103
      %p158 = pneg %p100
      %s159 = smul.u32 16, %s14
      %p160 = scmp.lt.s32.totalorder %s159, 31
      %s161 = scalar_select %p160, %s159, 31
      %s162 = smul.addr %s161, 8
      %s163 = scalar_lea.vmem %s3, %s162
      %s164 = smul.u32 16, %s14
      %p165 = scmp.lt.s32.totalorder %s164, 31
      %s166 = scalar_select %p165, %s164, 31
      %s167 = smul.addr %s166, 4
      %s168 = smul.addr %s167, 4
      %s169 = scalar_lea.vmem %s0, %s168
      %s170 = smul.u32 16, %s14
      %s171 = smul.u32 16, %s14
      %p172 = scmp.lt.s32.totalorder %s171, 31
      %s173 = scalar_select %p172, %s171, 31
      %s174 = smul.addr %s173, 8
      %s175 = scalar_lea.vmem %s3, %s174
      %s176 = smul.u32 16, %s14
      %v177 = vld [vmem:[%s169] sm:$0xff]
      %v178 = vld [vmem:[%s169 + $0x8] sm:$0xff]
      %v179 = vld [vmem:[%s169 + $0x10] sm:$0xff]
      %v180 = vld [vmem:[%s169 + $0x18] sm:$0xff]
      %v181 = vld [vmem:[%s169 + $0x20] sm:$0xff]
      %v182 = vld [vmem:[%s169 + $0x28] sm:$0xff]
      %v183 = vld [vmem:[%s169 + $0x30] sm:$0xff]
      %v184 = vld [vmem:[%s169 + $0x38] sm:$0xff]
      %v185 = vld [vmem:[%s169 + $0x40] sm:$0xff]
      %v186 = vld [vmem:[%s169 + $0x48] sm:$0xff]
      %v187 = vld [vmem:[%s169 + $0x50] sm:$0xff]
      %v188 = vld [vmem:[%s169 + $0x58] sm:$0xff]
      %v189 = vld [vmem:[%s169 + $0x60] sm:$0xff]
      %v190 = vld [vmem:[%s169 + $0x68] sm:$0xff]
      %v191 = vld [vmem:[%s169 + $0x70] sm:$0xff]
      %v192 = vld [vmem:[%s169 + $0x78] sm:$0xff]
      %v193 = vld [vmem:[%s169 + $0x80] sm:$0xff]
      %v194 = vld [vmem:[%s169 + $0x88] sm:$0xff]
      %v195 = vld [vmem:[%s169 + $0x90] sm:$0xff]
      %v196 = vld [vmem:[%s169 + $0x98] sm:$0xff]
      %v197 = vld [vmem:[%s169 + $0xa0] sm:$0xff]
      %v198 = vld [vmem:[%s169 + $0xa8] sm:$0xff]
      %v199 = vld [vmem:[%s169 + $0xb0] sm:$0xff]
      %v200 = vld [vmem:[%s169 + $0xb8] sm:$0xff]
      %v201 = vld [vmem:[%s169 + $0xc0] sm:$0xff]
      %v202 = vld [vmem:[%s169 + $0xc8] sm:$0xff]
      %v203 = vld [vmem:[%s169 + $0xd0] sm:$0xff]
      %v204 = vld [vmem:[%s169 + $0xd8] sm:$0xff]
      %v205 = vld [vmem:[%s169 + $0xe0] sm:$0xff]
      %v206 = vld [vmem:[%s169 + $0xe8] sm:$0xff]
      %v207 = vld [vmem:[%s169 + $0xf0] sm:$0xff]
      %v208 = vld [vmem:[%s169 + $0xf8] sm:$0xff]
      %v209 = vld [vmem:[%s1] sm:$0xf]
      %v210 = vld [vmem:[%s1 + $0x4] sm:$0xf]
      %v211 = vld [vmem:[%s1 + $0x8] sm:$0xf]
      %v212 = vld [vmem:[%s1 + $0xc] sm:$0xf]
      %v213 = vld [vmem:[%s1 + $0x10] sm:$0xf]
      %v214 = vld [vmem:[%s1 + $0x14] sm:$0xf]
      %v215 = vld [vmem:[%s1 + $0x18] sm:$0xf]
      %v216 = vld [vmem:[%s1 + $0x1c] sm:$0xf]
      %v217 = vld [vmem:[%s1 + $0x20] sm:$0xf]
      %v218 = vld [vmem:[%s1 + $0x24] sm:$0xf]
      %v219 = vld [vmem:[%s1 + $0x28] sm:$0xf]
      %v220 = vld [vmem:[%s1 + $0x2c] sm:$0xf]
      %v221 = vld [vmem:[%s1 + $0x30] sm:$0xf]
      %v222 = vld [vmem:[%s1 + $0x34] sm:$0xf]
      %v223 = vld [vmem:[%s1 + $0x38] sm:$0xf]
      %v224 = vld [vmem:[%s1 + $0x3c] sm:$0xf]
      %v225 = vld [vmem:[%s1 + $0x40] sm:$0xf]
      %v226 = vld [vmem:[%s1 + $0x44] sm:$0xf]
      %v227 = vld [vmem:[%s1 + $0x48] sm:$0xf]
      %v228 = vld [vmem:[%s1 + $0x4c] sm:$0xf]
      %v229 = vld [vmem:[%s1 + $0x50] sm:$0xf]
      %v230 = vld [vmem:[%s1 + $0x54] sm:$0xf]
      %v231 = vld [vmem:[%s1 + $0x58] sm:$0xf]
      %v232 = vld [vmem:[%s1 + $0x5c] sm:$0xf]
      %v233 = vld [vmem:[%s1 + $0x60] sm:$0xf]
      %v234 = vld [vmem:[%s1 + $0x64] sm:$0xf]
      %v235 = vld [vmem:[%s1 + $0x68] sm:$0xf]
      %v236 = vld [vmem:[%s1 + $0x6c] sm:$0xf]
      %v237 = vld [vmem:[%s1 + $0x70] sm:$0xf]
      %v238 = vld [vmem:[%s1 + $0x74] sm:$0xf]
      %v239 = vld [vmem:[%s1 + $0x78] sm:$0xf]
      %v240 = vld [vmem:[%s1 + $0x7c] sm:$0xf]
      %v241 = vld [vmem:[%s1 + $0x80] sm:$0xf]
      %v242 = vld [vmem:[%s1 + $0x84] sm:$0xf]
      %v243 = vld [vmem:[%s1 + $0x88] sm:$0xf]
      %v244 = vld [vmem:[%s1 + $0x8c] sm:$0xf]
      %v245 = vld [vmem:[%s1 + $0x90] sm:$0xf]
      %v246 = vld [vmem:[%s1 + $0x94] sm:$0xf]
      %v247 = vld [vmem:[%s1 + $0x98] sm:$0xf]
      %v248 = vld [vmem:[%s1 + $0x9c] sm:$0xf]
      %v249 = vld [vmem:[%s1 + $0xa0] sm:$0xf]
      %v250 = vld [vmem:[%s1 + $0xa4] sm:$0xf]
      %v251 = vld [vmem:[%s1 + $0xa8] sm:$0xf]
      %v252 = vld [vmem:[%s1 + $0xac] sm:$0xf]
      %v253 = vld [vmem:[%s1 + $0xb0] sm:$0xf]
      %v254 = vld [vmem:[%s1 + $0xb4] sm:$0xf]
      %v255 = vld [vmem:[%s1 + $0xb8] sm:$0xf]
      %v256 = vld [vmem:[%s1 + $0xbc] sm:$0xf]
      %v257 = vld [vmem:[%s1 + $0xc0] sm:$0xf]
      %v258 = vld [vmem:[%s1 + $0xc4] sm:$0xf]
      %v259 = vld [vmem:[%s1 + $0xc8] sm:$0xf]
      %v260 = vld [vmem:[%s1 + $0xcc] sm:$0xf]
      %v261 = vld [vmem:[%s1 + $0xd0] sm:$0xf]
      %v262 = vld [vmem:[%s1 + $0xd4] sm:$0xf]
      %v263 = vld [vmem:[%s1 + $0xd8] sm:$0xf]
      %v264 = vld [vmem:[%s1 + $0xdc] sm:$0xf]
      %v265 = vld [vmem:[%s1 + $0xe0] sm:$0xf]
      %v266 = vld [vmem:[%s1 + $0xe4] sm:$0xf]
      %v267 = vld [vmem:[%s1 + $0xe8] sm:$0xf]
      %v268 = vld [vmem:[%s1 + $0xec] sm:$0xf]
      %v269 = vld [vmem:[%s1 + $0xf0] sm:$0xf]
      %v270 = vld [vmem:[%s1 + $0xf4] sm:$0xf]
      %v271 = vld [vmem:[%s1 + $0xf8] sm:$0xf]
      %v272 = vld [vmem:[%s1 + $0xfc] sm:$0xf]
      %v273 = vld [vmem:[%s2] sm:$0x1]
      %v275 = vperm.slane %v273, 0
      %v309 = vunpack.c.l.b16 %v177
      %v310 = vunpack.c.h.b16 %v177
      %v311 = vunpack.c.l.b16 %v178
      %v312 = vunpack.c.h.b16 %v178
      %v313 = vunpack.c.l.b16 %v179
      %v314 = vunpack.c.h.b16 %v179
      %v315 = vunpack.c.l.b16 %v180
      %v316 = vunpack.c.h.b16 %v180
      %v317 = vunpack.c.l.b16 %v181
      %v318 = vunpack.c.h.b16 %v181
      %v319 = vunpack.c.l.b16 %v182
      %v320 = vunpack.c.h.b16 %v182
      %v321 = vunpack.c.l.b16 %v183
      %v322 = vunpack.c.h.b16 %v183
      %v323 = vunpack.c.l.b16 %v184
      %v324 = vunpack.c.h.b16 %v184
      %v325 = vunpack.c.l.b16 %v185
      %v326 = vunpack.c.h.b16 %v185
      %v327 = vunpack.c.l.b16 %v186
      %v328 = vunpack.c.h.b16 %v186
      %v329 = vunpack.c.l.b16 %v187
      %v330 = vunpack.c.h.b16 %v187
      %v331 = vunpack.c.l.b16 %v188
      %v332 = vunpack.c.h.b16 %v188
      %v333 = vunpack.c.l.b16 %v189
      %v334 = vunpack.c.h.b16 %v189
      %v335 = vunpack.c.l.b16 %v190
      %v336 = vunpack.c.h.b16 %v190
      %v337 = vunpack.c.l.b16 %v191
      %v338 = vunpack.c.h.b16 %v191
      %v339 = vunpack.c.l.b16 %v192
      %v340 = vunpack.c.h.b16 %v192
      %v341 = vunpack.c.l.b16 %v193
      %v342 = vunpack.c.h.b16 %v193
      %v343 = vunpack.c.l.b16 %v194
      %v344 = vunpack.c.h.b16 %v194
      %v345 = vunpack.c.l.b16 %v195
      %v346 = vunpack.c.h.b16 %v195
      %v347 = vunpack.c.l.b16 %v196
      %v348 = vunpack.c.h.b16 %v196
      %v349 = vunpack.c.l.b16 %v197
      %v350 = vunpack.c.h.b16 %v197
      %v351 = vunpack.c.l.b16 %v198
      %v352 = vunpack.c.h.b16 %v198
      %v353 = vunpack.c.l.b16 %v199
      %v354 = vunpack.c.h.b16 %v199
      %v355 = vunpack.c.l.b16 %v200
      %v356 = vunpack.c.h.b16 %v200
      %v357 = vunpack.c.l.b16 %v201
      %v358 = vunpack.c.h.b16 %v201
      %v359 = vunpack.c.l.b16 %v202
      %v360 = vunpack.c.h.b16 %v202
      %v361 = vunpack.c.l.b16 %v203
      %v362 = vunpack.c.h.b16 %v203
      %v363 = vunpack.c.l.b16 %v204
      %v364 = vunpack.c.h.b16 %v204
      %v365 = vunpack.c.l.b16 %v205
      %v366 = vunpack.c.h.b16 %v205
      %v367 = vunpack.c.l.b16 %v206
      %v368 = vunpack.c.h.b16 %v206
      %v369 = vunpack.c.l.b16 %v207
      %v370 = vunpack.c.h.b16 %v207
      %v371 = vunpack.c.l.b16 %v208
      %v372 = vunpack.c.h.b16 %v208
      %v373 = vpack.c.b16 %v313, %v309
      %v374 = vpack.c.b16 %v314, %v310
      %v375 = vpack.c.b16 %v315, %v311
      %v376 = vpack.c.b16 %v316, %v312
      %v377 = vpack.c.b16 %v321, %v317
      %v378 = vpack.c.b16 %v322, %v318
      %v379 = vpack.c.b16 %v323, %v319
      %v380 = vpack.c.b16 %v324, %v320
      %v381 = vpack.c.b16 %v329, %v325
      %v382 = vpack.c.b16 %v330, %v326
      %v383 = vpack.c.b16 %v331, %v327
      %v384 = vpack.c.b16 %v332, %v328
      %v385 = vpack.c.b16 %v337, %v333
      %v386 = vpack.c.b16 %v338, %v334
      %v387 = vpack.c.b16 %v339, %v335
      %v388 = vpack.c.b16 %v340, %v336
      %v389 = vpack.c.b16 %v345, %v341
      %v390 = vpack.c.b16 %v346, %v342
      %v391 = vpack.c.b16 %v347, %v343
      %v392 = vpack.c.b16 %v348, %v344
      %v393 = vpack.c.b16 %v353, %v349
      %v394 = vpack.c.b16 %v354, %v350
      %v395 = vpack.c.b16 %v355, %v351
      %v396 = vpack.c.b16 %v356, %v352
      %v397 = vpack.c.b16 %v361, %v357
      %v398 = vpack.c.b16 %v362, %v358
      %v399 = vpack.c.b16 %v363, %v359
      %v400 = vpack.c.b16 %v364, %v360
      %v401 = vpack.c.b16 %v369, %v365
      %v402 = vpack.c.b16 %v370, %v366
      %v403 = vpack.c.b16 %v371, %v367
      %v404 = vpack.c.b16 %v372, %v368
      %v501 = vunpack.c.l.b16 %v209
      %v502 = vunpack.c.l.b16 %v210
      %v503 = vunpack.c.l.b16 %v211
      %v504 = vunpack.c.l.b16 %v212
      %v505 = vunpack.c.l.b16 %v213
      %v506 = vunpack.c.l.b16 %v214
      %v507 = vunpack.c.l.b16 %v215
      %v508 = vunpack.c.l.b16 %v216
      %v509 = vunpack.c.l.b16 %v217
      %v510 = vunpack.c.l.b16 %v218
      %v511 = vunpack.c.l.b16 %v219
      %v512 = vunpack.c.l.b16 %v220
      %v513 = vunpack.c.l.b16 %v221
      %v514 = vunpack.c.l.b16 %v222
      %v515 = vunpack.c.l.b16 %v223
      %v516 = vunpack.c.l.b16 %v224
      %v517 = vunpack.c.l.b16 %v225
      %v518 = vunpack.c.l.b16 %v226
      %v519 = vunpack.c.l.b16 %v227
      %v520 = vunpack.c.l.b16 %v228
      %v521 = vunpack.c.l.b16 %v229
      %v522 = vunpack.c.l.b16 %v230
      %v523 = vunpack.c.l.b16 %v231
      %v524 = vunpack.c.l.b16 %v232
      %v525 = vunpack.c.l.b16 %v233
      %v526 = vunpack.c.l.b16 %v234
      %v527 = vunpack.c.l.b16 %v235
      %v528 = vunpack.c.l.b16 %v236
      %v529 = vunpack.c.l.b16 %v237
      %v530 = vunpack.c.l.b16 %v238
      %v531 = vunpack.c.l.b16 %v239
      %v532 = vunpack.c.l.b16 %v240
      %v533 = vunpack.c.l.b16 %v241
      %v534 = vunpack.c.l.b16 %v242
      %v535 = vunpack.c.l.b16 %v243
      %v536 = vunpack.c.l.b16 %v244
      %v537 = vunpack.c.l.b16 %v245
      %v538 = vunpack.c.l.b16 %v246
      %v539 = vunpack.c.l.b16 %v247
      %v540 = vunpack.c.l.b16 %v248
      %v541 = vunpack.c.l.b16 %v249
      %v542 = vunpack.c.l.b16 %v250
      %v543 = vunpack.c.l.b16 %v251
      %v544 = vunpack.c.l.b16 %v252
      %v545 = vunpack.c.l.b16 %v253
      %v546 = vunpack.c.l.b16 %v254
      %v547 = vunpack.c.l.b16 %v255
      %v548 = vunpack.c.l.b16 %v256
      %v549 = vunpack.c.l.b16 %v257
      %v550 = vunpack.c.l.b16 %v258
      %v551 = vunpack.c.l.b16 %v259
      %v552 = vunpack.c.l.b16 %v260
      %v553 = vunpack.c.l.b16 %v261
      %v554 = vunpack.c.l.b16 %v262
      %v555 = vunpack.c.l.b16 %v263
      %v556 = vunpack.c.l.b16 %v264
      %v557 = vunpack.c.l.b16 %v265
      %v558 = vunpack.c.l.b16 %v266
      %v559 = vunpack.c.l.b16 %v267
      %v560 = vunpack.c.l.b16 %v268
      %v561 = vunpack.c.l.b16 %v269
      %v562 = vunpack.c.l.b16 %v270
      %v563 = vunpack.c.l.b16 %v271
      %v564 = vunpack.c.l.b16 %v272
      %v565 = vpack.c.b16 %v502, %v501
      %v566 = vpack.c.b16 %v504, %v503
      %v567 = vpack.c.b16 %v506, %v505
      %v568 = vpack.c.b16 %v508, %v507
      %v569 = vpack.c.b16 %v510, %v509
      %v570 = vpack.c.b16 %v512, %v511
      %v571 = vpack.c.b16 %v514, %v513
      %v572 = vpack.c.b16 %v516, %v515
      %v573 = vpack.c.b16 %v518, %v517
      %v574 = vpack.c.b16 %v520, %v519
      %v575 = vpack.c.b16 %v522, %v521
      %v576 = vpack.c.b16 %v524, %v523
      %v577 = vpack.c.b16 %v526, %v525
      %v578 = vpack.c.b16 %v528, %v527
      %v579 = vpack.c.b16 %v530, %v529
      %v580 = vpack.c.b16 %v532, %v531
      %v581 = vpack.c.b16 %v534, %v533
      %v582 = vpack.c.b16 %v536, %v535
      %v583 = vpack.c.b16 %v538, %v537
      %v584 = vpack.c.b16 %v540, %v539
      %v585 = vpack.c.b16 %v542, %v541
      %v586 = vpack.c.b16 %v544, %v543
      %v587 = vpack.c.b16 %v546, %v545
      %v588 = vpack.c.b16 %v548, %v547
      %v589 = vpack.c.b16 %v550, %v549
      %v590 = vpack.c.b16 %v552, %v551
      %v591 = vpack.c.b16 %v554, %v553
      %v592 = vpack.c.b16 %v556, %v555
      %v593 = vpack.c.b16 %v558, %v557
      %v594 = vpack.c.b16 %v560, %v559
      %v595 = vpack.c.b16 %v562, %v561
      %v596 = vpack.c.b16 %v564, %v563
      %629 = vmatpush.bf16.msra.mxu0 %v572
      %630 = vmatpush.bf16.msra.mxu0 %v571
      %631 = vmatpush.bf16.msra.mxu0 %v570
      %632 = vmatpush.bf16.msra.mxu0 %v569
      %633 = vmatpush.bf16.msra.mxu0 %v568
      %634 = vmatpush.bf16.msra.mxu0 %v567
      %635 = vmatpush.bf16.msra.mxu0 %v566
      %636 = vmatpush.bf16.msra.mxu0 %v565
      %637 = vmatmul.bf16.gmra.mxu0 %v373
      %v638 = vpop.f32.mrf.mxu0
      %v639 = vadd.f32 %v275, %v638
      %v640 = vpop.f32.mrf.mxu0
      %v641 = vadd.f32 %v275, %v640
      %642 = vmatmul.bf16.gmra.mxu0 %v377
      %v643 = vpop.f32.mrf.mxu0
      %v644 = vadd.f32 %v275, %v643
      %v645 = vpop.f32.mrf.mxu0
      %v646 = vadd.f32 %v275, %v645
      %647 = vmatmul.bf16.gmra.mxu0 %v381
      %v648 = vpop.f32.mrf.mxu0
      %v649 = vadd.f32 %v275, %v648
      %v650 = vpop.f32.mrf.mxu0
      %v651 = vadd.f32 %v275, %v650
      %652 = vmatmul.bf16.gmra.mxu0 %v385
      %v653 = vpop.f32.mrf.mxu0
      %v654 = vadd.f32 %v275, %v653
      %v655 = vpop.f32.mrf.mxu0
      %v656 = vadd.f32 %v275, %v655
      %657 = vmatmul.bf16.gmra.mxu0 %v389
      %v658 = vpop.f32.mrf.mxu0
      %v659 = vadd.f32 %v275, %v658
      %v660 = vpop.f32.mrf.mxu0
      %v661 = vadd.f32 %v275, %v660
      %662 = vmatmul.bf16.gmra.mxu0 %v393
      %v663 = vpop.f32.mrf.mxu0
      %v664 = vadd.f32 %v275, %v663
      %v665 = vpop.f32.mrf.mxu0
      %v666 = vadd.f32 %v275, %v665
      %667 = vmatmul.bf16.gmra.mxu0 %v397
      %v668 = vpop.f32.mrf.mxu0
      %v669 = vadd.f32 %v275, %v668
      %v670 = vpop.f32.mrf.mxu0
      %v671 = vadd.f32 %v275, %v670
      %672 = vmatmul.bf16.gmra.mxu0 %v401
      %v673 = vpop.f32.mrf.mxu0
      %v674 = vadd.f32 %v275, %v673
      %v675 = vpop.f32.mrf.mxu0
      %v676 = vadd.f32 %v275, %v675
      %677 = vdwg.mxu0
      %678 = vmatpush.bf16.msra.mxu0 %v580
      %679 = vmatpush.bf16.msra.mxu0 %v579
      %680 = vmatpush.bf16.msra.mxu0 %v578
      %681 = vmatpush.bf16.msra.mxu0 %v577
      %682 = vmatpush.bf16.msra.mxu0 %v576
      %683 = vmatpush.bf16.msra.mxu0 %v575
      %684 = vmatpush.bf16.msra.mxu0 %v574
      %685 = vmatpush.bf16.msra.mxu0 %v573
      %686 = vmatmul.bf16.gmra.mxu0 %v374
      %v687 = vpop.f32.mrf.mxu0
      %v688 = vadd.f32 %v639, %v687
      %v689 = vpop.f32.mrf.mxu0
      %v690 = vadd.f32 %v641, %v689
      %691 = vmatmul.bf16.gmra.mxu0 %v378
      %v692 = vpop.f32.mrf.mxu0
      %v693 = vadd.f32 %v644, %v692
      %v694 = vpop.f32.mrf.mxu0
      %v695 = vadd.f32 %v646, %v694
      %696 = vmatmul.bf16.gmra.mxu0 %v382
      %v697 = vpop.f32.mrf.mxu0
      %v698 = vadd.f32 %v649, %v697
      %v699 = vpop.f32.mrf.mxu0
      %v700 = vadd.f32 %v651, %v699
      %701 = vmatmul.bf16.gmra.mxu0 %v386
      %v702 = vpop.f32.mrf.mxu0
      %v703 = vadd.f32 %v654, %v702
      %v704 = vpop.f32.mrf.mxu0
      %v705 = vadd.f32 %v656, %v704
      %706 = vmatmul.bf16.gmra.mxu0 %v390
      %v707 = vpop.f32.mrf.mxu0
      %v708 = vadd.f32 %v659, %v707
      %v709 = vpop.f32.mrf.mxu0
      %v710 = vadd.f32 %v661, %v709
      %711 = vmatmul.bf16.gmra.mxu0 %v394
      %v712 = vpop.f32.mrf.mxu0
      %v713 = vadd.f32 %v664, %v712
      %v714 = vpop.f32.mrf.mxu0
      %v715 = vadd.f32 %v666, %v714
      %716 = vmatmul.bf16.gmra.mxu0 %v398
      %v717 = vpop.f32.mrf.mxu0
      %v718 = vadd.f32 %v669, %v717
      %v719 = vpop.f32.mrf.mxu0
      %v720 = vadd.f32 %v671, %v719
      %721 = vmatmul.bf16.gmra.mxu0 %v402
      %v722 = vpop.f32.mrf.mxu0
      %v723 = vadd.f32 %v674, %v722
      %v724 = vpop.f32.mrf.mxu0
      %v725 = vadd.f32 %v676, %v724
      %726 = vdwg.mxu0
      %727 = vmatpush.bf16.msra.mxu0 %v588
      %728 = vmatpush.bf16.msra.mxu0 %v587
      %729 = vmatpush.bf16.msra.mxu0 %v586
      %730 = vmatpush.bf16.msra.mxu0 %v585
      %731 = vmatpush.bf16.msra.mxu0 %v584
      %732 = vmatpush.bf16.msra.mxu0 %v583
      %733 = vmatpush.bf16.msra.mxu0 %v582
      %734 = vmatpush.bf16.msra.mxu0 %v581
      %735 = vmatmul.bf16.gmra.mxu0 %v375
      %v736 = vpop.f32.mrf.mxu0
      %v737 = vadd.f32 %v688, %v736
      %v738 = vpop.f32.mrf.mxu0
      %v739 = vadd.f32 %v690, %v738
      %740 = vmatmul.bf16.gmra.mxu0 %v379
      %v741 = vpop.f32.mrf.mxu0
      %v742 = vadd.f32 %v693, %v741
      %v743 = vpop.f32.mrf.mxu0
      %v744 = vadd.f32 %v695, %v743
      %745 = vmatmul.bf16.gmra.mxu0 %v383
      %v746 = vpop.f32.mrf.mxu0
      %v747 = vadd.f32 %v698, %v746
      %v748 = vpop.f32.mrf.mxu0
      %v749 = vadd.f32 %v700, %v748
      %750 = vmatmul.bf16.gmra.mxu0 %v387
      %v751 = vpop.f32.mrf.mxu0
      %v752 = vadd.f32 %v703, %v751
      %v753 = vpop.f32.mrf.mxu0
      %v754 = vadd.f32 %v705, %v753
      %755 = vmatmul.bf16.gmra.mxu0 %v391
      %v756 = vpop.f32.mrf.mxu0
      %v757 = vadd.f32 %v708, %v756
      %v758 = vpop.f32.mrf.mxu0
      %v759 = vadd.f32 %v710, %v758
      %760 = vmatmul.bf16.gmra.mxu0 %v395
      %v761 = vpop.f32.mrf.mxu0
      %v762 = vadd.f32 %v713, %v761
      %v763 = vpop.f32.mrf.mxu0
      %v764 = vadd.f32 %v715, %v763
      %765 = vmatmul.bf16.gmra.mxu0 %v399
      %v766 = vpop.f32.mrf.mxu0
      %v767 = vadd.f32 %v718, %v766
      %v768 = vpop.f32.mrf.mxu0
      %v769 = vadd.f32 %v720, %v768
      %770 = vmatmul.bf16.gmra.mxu0 %v403
      %v771 = vpop.f32.mrf.mxu0
      %v772 = vadd.f32 %v723, %v771
      %v773 = vpop.f32.mrf.mxu0
      %v774 = vadd.f32 %v725, %v773
      %775 = vdwg.mxu0
      %776 = vmatpush.bf16.msra.mxu0 %v596
      %777 = vmatpush.bf16.msra.mxu0 %v595
      %778 = vmatpush.bf16.msra.mxu0 %v594
      %779 = vmatpush.bf16.msra.mxu0 %v593
      %780 = vmatpush.bf16.msra.mxu0 %v592
      %781 = vmatpush.bf16.msra.mxu0 %v591
      %782 = vmatpush.bf16.msra.mxu0 %v590
      %783 = vmatpush.bf16.msra.mxu0 %v589
      %784 = vmatmul.bf16.gmra.mxu0 %v376
      %v785 = vpop.f32.mrf.mxu0
      %v786 = vadd.f32 %v737, %v785
      %v787 = vpop.f32.mrf.mxu0
      %v788 = vadd.f32 %v739, %v787
      %789 = vmatmul.bf16.gmra.mxu0 %v380
      %v790 = vpop.f32.mrf.mxu0
      %v791 = vadd.f32 %v742, %v790
      %v792 = vpop.f32.mrf.mxu0
      %v793 = vadd.f32 %v744, %v792
      %794 = vmatmul.bf16.gmra.mxu0 %v384
      %v795 = vpop.f32.mrf.mxu0
      %v796 = vadd.f32 %v747, %v795
      %v797 = vpop.f32.mrf.mxu0
      %v798 = vadd.f32 %v749, %v797
      %799 = vmatmul.bf16.gmra.mxu0 %v388
      %v800 = vpop.f32.mrf.mxu0
      %v801 = vadd.f32 %v752, %v800
      %v802 = vpop.f32.mrf.mxu0
      %v803 = vadd.f32 %v754, %v802
      %804 = vmatmul.bf16.gmra.mxu0 %v392
      %v805 = vpop.f32.mrf.mxu0
      %v806 = vadd.f32 %v757, %v805
      %v807 = vpop.f32.mrf.mxu0
      %v808 = vadd.f32 %v759, %v807
      %809 = vmatmul.bf16.gmra.mxu0 %v396
      %v810 = vpop.f32.mrf.mxu0
      %v811 = vadd.f32 %v762, %v810
      %v812 = vpop.f32.mrf.mxu0
      %v813 = vadd.f32 %v764, %v812
      %814 = vmatmul.bf16.gmra.mxu0 %v400
      %v815 = vpop.f32.mrf.mxu0
      %v816 = vadd.f32 %v767, %v815
      %v817 = vpop.f32.mrf.mxu0
      %v818 = vadd.f32 %v769, %v817
      %819 = vmatmul.bf16.gmra.mxu0 %v404
      %v820 = vpop.f32.mrf.mxu0
      %v821 = vadd.f32 %v772, %v820
      %v822 = vpop.f32.mrf.mxu0
      %v823 = vadd.f32 %v774, %v822
      %824 = vdwg.mxu0
      %825 = vmax.xlane.f32.xlu0 %v786
      %v826 = vpop.xlane.xlu0 %825
      %827 = vmax.xlane.f32.xlu0 %v788
      %v828 = vpop.xlane.xlu0 %827
      %829 = vmax.xlane.f32.xlu0 %v791
      %v830 = vpop.xlane.xlu0 %829
      %831 = vmax.xlane.f32.xlu0 %v793
      %v832 = vpop.xlane.xlu0 %831
      %833 = vmax.xlane.f32.xlu0 %v796
      %v834 = vpop.xlane.xlu0 %833
      %835 = vmax.xlane.f32.xlu0 %v798
      %v836 = vpop.xlane.xlu0 %835
      %837 = vmax.xlane.f32.xlu0 %v801
      %v838 = vpop.xlane.xlu0 %837
      %839 = vmax.xlane.f32.xlu0 %v803
      %v840 = vpop.xlane.xlu0 %839
      %841 = vmax.xlane.f32.xlu0 %v806
      %v842 = vpop.xlane.xlu0 %841
      %843 = vmax.xlane.f32.xlu0 %v808
      %v844 = vpop.xlane.xlu0 %843
      %845 = vmax.xlane.f32.xlu0 %v811
      %v846 = vpop.xlane.xlu0 %845
      %847 = vmax.xlane.f32.xlu0 %v813
      %v848 = vpop.xlane.xlu0 %847
      %849 = vmax.xlane.f32.xlu0 %v816
      %v850 = vpop.xlane.xlu0 %849
      %851 = vmax.xlane.f32.xlu0 %v818
      %v852 = vpop.xlane.xlu0 %851
      %853 = vmax.xlane.f32.xlu0 %v821
      %v854 = vpop.xlane.xlu0 %853
      %855 = vmax.xlane.f32.xlu0 %v823
      %v856 = vpop.xlane.xlu0 %855
      %v857 = vsub.f32 %v786, %v826
      %v858 = vsub.f32 %v788, %v828
      %v859 = vsub.f32 %v791, %v830
      %v860 = vsub.f32 %v793, %v832
      %v861 = vsub.f32 %v796, %v834
      %v862 = vsub.f32 %v798, %v836
      %v863 = vsub.f32 %v801, %v838
      %v864 = vsub.f32 %v803, %v840
      %v865 = vsub.f32 %v806, %v842
      %v866 = vsub.f32 %v808, %v844
      %v867 = vsub.f32 %v811, %v846
      %v868 = vsub.f32 %v813, %v848
      %v869 = vsub.f32 %v816, %v850
      %v870 = vsub.f32 %v818, %v852
      %v871 = vsub.f32 %v821, %v854
      %v872 = vsub.f32 %v823, %v856
      %v873 = vmul.f32 %v857, 1.442695
      %v874 = vpow.pop %v873
      %v875 = vmul.f32 %v858, 1.442695
      %v876 = vpow.pop %v875
      %v877 = vmul.f32 %v859, 1.442695
      %v878 = vpow.pop %v877
      %v879 = vmul.f32 %v860, 1.442695
      %v880 = vpow.pop %v879
      %v881 = vmul.f32 %v861, 1.442695
      %v882 = vpow.pop %v881
      %v883 = vmul.f32 %v862, 1.442695
      %v884 = vpow.pop %v883
      %v885 = vmul.f32 %v863, 1.442695
      %v886 = vpow.pop %v885
      %v887 = vmul.f32 %v864, 1.442695
      %v888 = vpow.pop %v887
      %v889 = vmul.f32 %v865, 1.442695
      %v890 = vpow.pop %v889
      %v891 = vmul.f32 %v866, 1.442695
      %v892 = vpow.pop %v891
      %v893 = vmul.f32 %v867, 1.442695
      %v894 = vpow.pop %v893
      %v895 = vmul.f32 %v868, 1.442695
      %v896 = vpow.pop %v895
      %v897 = vmul.f32 %v869, 1.442695
      %v898 = vpow.pop %v897
      %v899 = vmul.f32 %v870, 1.442695
      %v900 = vpow.pop %v899
      %v901 = vmul.f32 %v871, 1.442695
      %v902 = vpow.pop %v901
      %v903 = vmul.f32 %v872, 1.442695
      %v904 = vpow.pop %v903
      %905 = vadd.xlane.f32.xlu0 %v874
      %v906 = vpop.xlane.xlu0 %905
      %907 = vadd.xlane.f32.xlu0 %v876
      %v908 = vpop.xlane.xlu0 %907
      %909 = vadd.xlane.f32.xlu0 %v878
      %v910 = vpop.xlane.xlu0 %909
      %911 = vadd.xlane.f32.xlu0 %v880
      %v912 = vpop.xlane.xlu0 %911
      %913 = vadd.xlane.f32.xlu0 %v882
      %v914 = vpop.xlane.xlu0 %913
      %915 = vadd.xlane.f32.xlu0 %v884
      %v916 = vpop.xlane.xlu0 %915
      %917 = vadd.xlane.f32.xlu0 %v886
      %v918 = vpop.xlane.xlu0 %917
      %919 = vadd.xlane.f32.xlu0 %v888
      %v920 = vpop.xlane.xlu0 %919
      %921 = vadd.xlane.f32.xlu0 %v890
      %v922 = vpop.xlane.xlu0 %921
      %923 = vadd.xlane.f32.xlu0 %v892
      %v924 = vpop.xlane.xlu0 %923
      %925 = vadd.xlane.f32.xlu0 %v894
      %v926 = vpop.xlane.xlu0 %925
      %927 = vadd.xlane.f32.xlu0 %v896
      %v928 = vpop.xlane.xlu0 %927
      %929 = vadd.xlane.f32.xlu0 %v898
      %v930 = vpop.xlane.xlu0 %929
      %931 = vadd.xlane.f32.xlu0 %v900
      %v932 = vpop.xlane.xlu0 %931
      %933 = vadd.xlane.f32.xlu0 %v902
      %v934 = vpop.xlane.xlu0 %933
      %935 = vadd.xlane.f32.xlu0 %v904
      %v936 = vpop.xlane.xlu0 %935
      %v937 = vrcp.pop %v906
      %v938 = vmul.f32 %v906, %v937
      %v939 = vsub.f32 1.0, %v938
      %v940 = vmul.f32 %v937, %v939
      %v941 = vadd.f32 %v937, %v940
      %vm942 = vweird.f32 %v906
      %vm943 = vweird.f32 %v937
      %vm944 = vmor %vm942, %vm943
      %v945 = vsel %vm944, %v937, %v941
      %v946 = vand.u32 2147483647, %v906
      %vm947 = vcmp.eq.f32.partialorder %v946, 8.507059e+37
      %v948 = vand.u32 %v906, 2147483648
      %v949 = vor.u32 1.1754944e-38, %v948
      %v950 = vsel %vm947, %v949, %v945
      %v951 = vmul.f32 %v874, %v950
      %v952 = vrcp.pop %v908
      %v953 = vmul.f32 %v908, %v952
      %v954 = vsub.f32 1.0, %v953
      %v955 = vmul.f32 %v952, %v954
      %v956 = vadd.f32 %v952, %v955
      %vm957 = vweird.f32 %v908
      %vm958 = vweird.f32 %v952
      %vm959 = vmor %vm957, %vm958
      %v960 = vsel %vm959, %v952, %v956
      %v961 = vand.u32 2147483647, %v908
      %vm962 = vcmp.eq.f32.partialorder %v961, 8.507059e+37
      %v963 = vand.u32 %v908, 2147483648
      %v964 = vor.u32 1.1754944e-38, %v963
      %v965 = vsel %vm962, %v964, %v960
      %v966 = vmul.f32 %v876, %v965
      %v967 = vrcp.pop %v910
      %v968 = vmul.f32 %v910, %v967
      %v969 = vsub.f32 1.0, %v968
      %v970 = vmul.f32 %v967, %v969
      %v971 = vadd.f32 %v967, %v970
      %vm972 = vweird.f32 %v910
      %vm973 = vweird.f32 %v967
      %vm974 = vmor %vm972, %vm973
      %v975 = vsel %vm974, %v967, %v971
      %v976 = vand.u32 2147483647, %v910
      %vm977 = vcmp.eq.f32.partialorder %v976, 8.507059e+37
      %v978 = vand.u32 %v910, 2147483648
      %v979 = vor.u32 1.1754944e-38, %v978
      %v980 = vsel %vm977, %v979, %v975
      %v981 = vmul.f32 %v878, %v980
      %v982 = vrcp.pop %v912
      %v983 = vmul.f32 %v912, %v982
      %v984 = vsub.f32 1.0, %v983
      %v985 = vmul.f32 %v982, %v984
      %v986 = vadd.f32 %v982, %v985
      %vm987 = vweird.f32 %v912
      %vm988 = vweird.f32 %v982
      %vm989 = vmor %vm987, %vm988
      %v990 = vsel %vm989, %v982, %v986
      %v991 = vand.u32 2147483647, %v912
      %vm992 = vcmp.eq.f32.partialorder %v991, 8.507059e+37
      %v993 = vand.u32 %v912, 2147483648
      %v994 = vor.u32 1.1754944e-38, %v993
      %v995 = vsel %vm992, %v994, %v990
      %v996 = vmul.f32 %v880, %v995
      %v997 = vrcp.pop %v914
      %v998 = vmul.f32 %v914, %v997
      %v999 = vsub.f32 1.0, %v998
      %v1000 = vmul.f32 %v997, %v999
      %v1001 = vadd.f32 %v997, %v1000
      %vm1002 = vweird.f32 %v914
      %vm1003 = vweird.f32 %v997
      %vm1004 = vmor %vm1002, %vm1003
      %v1005 = vsel %vm1004, %v997, %v1001
      %v1006 = vand.u32 2147483647, %v914
      %vm1007 = vcmp.eq.f32.partialorder %v1006, 8.507059e+37
      %v1008 = vand.u32 %v914, 2147483648
      %v1009 = vor.u32 1.1754944e-38, %v1008
      %v1010 = vsel %vm1007, %v1009, %v1005
      %v1011 = vmul.f32 %v882, %v1010
      %v1012 = vrcp.pop %v916
      %v1013 = vmul.f32 %v916, %v1012
      %v1014 = vsub.f32 1.0, %v1013
      %v1015 = vmul.f32 %v1012, %v1014
      %v1016 = vadd.f32 %v1012, %v1015
      %vm1017 = vweird.f32 %v916
      %vm1018 = vweird.f32 %v1012
      %vm1019 = vmor %vm1017, %vm1018
      %v1020 = vsel %vm1019, %v1012, %v1016
      %v1021 = vand.u32 2147483647, %v916
      %vm1022 = vcmp.eq.f32.partialorder %v1021, 8.507059e+37
      %v1023 = vand.u32 %v916, 2147483648
      %v1024 = vor.u32 1.1754944e-38, %v1023
      %v1025 = vsel %vm1022, %v1024, %v1020
      %v1026 = vmul.f32 %v884, %v1025
      %v1027 = vrcp.pop %v918
      %v1028 = vmul.f32 %v918, %v1027
      %v1029 = vsub.f32 1.0, %v1028
      %v1030 = vmul.f32 %v1027, %v1029
      %v1031 = vadd.f32 %v1027, %v1030
      %vm1032 = vweird.f32 %v918
      %vm1033 = vweird.f32 %v1027
      %vm1034 = vmor %vm1032, %vm1033
      %v1035 = vsel %vm1034, %v1027, %v1031
      %v1036 = vand.u32 2147483647, %v918
      %vm1037 = vcmp.eq.f32.partialorder %v1036, 8.507059e+37
      %v1038 = vand.u32 %v918, 2147483648
      %v1039 = vor.u32 1.1754944e-38, %v1038
      %v1040 = vsel %vm1037, %v1039, %v1035
      %v1041 = vmul.f32 %v886, %v1040
      %v1042 = vrcp.pop %v920
      %v1043 = vmul.f32 %v920, %v1042
      %v1044 = vsub.f32 1.0, %v1043
      %v1045 = vmul.f32 %v1042, %v1044
      %v1046 = vadd.f32 %v1042, %v1045
      %vm1047 = vweird.f32 %v920
      %vm1048 = vweird.f32 %v1042
      %vm1049 = vmor %vm1047, %vm1048
      %v1050 = vsel %vm1049, %v1042, %v1046
      %v1051 = vand.u32 2147483647, %v920
      %vm1052 = vcmp.eq.f32.partialorder %v1051, 8.507059e+37
      %v1053 = vand.u32 %v920, 2147483648
      %v1054 = vor.u32 1.1754944e-38, %v1053
      %v1055 = vsel %vm1052, %v1054, %v1050
      %v1056 = vmul.f32 %v888, %v1055
      %v1057 = vrcp.pop %v922
      %v1058 = vmul.f32 %v922, %v1057
      %v1059 = vsub.f32 1.0, %v1058
      %v1060 = vmul.f32 %v1057, %v1059
      %v1061 = vadd.f32 %v1057, %v1060
      %vm1062 = vweird.f32 %v922
      %vm1063 = vweird.f32 %v1057
      %vm1064 = vmor %vm1062, %vm1063
      %v1065 = vsel %vm1064, %v1057, %v1061
      %v1066 = vand.u32 2147483647, %v922
      %vm1067 = vcmp.eq.f32.partialorder %v1066, 8.507059e+37
      %v1068 = vand.u32 %v922, 2147483648
      %v1069 = vor.u32 1.1754944e-38, %v1068
      %v1070 = vsel %vm1067, %v1069, %v1065
      %v1071 = vmul.f32 %v890, %v1070
      %v1072 = vrcp.pop %v924
      %v1073 = vmul.f32 %v924, %v1072
      %v1074 = vsub.f32 1.0, %v1073
      %v1075 = vmul.f32 %v1072, %v1074
      %v1076 = vadd.f32 %v1072, %v1075
      %vm1077 = vweird.f32 %v924
      %vm1078 = vweird.f32 %v1072
      %vm1079 = vmor %vm1077, %vm1078
      %v1080 = vsel %vm1079, %v1072, %v1076
      %v1081 = vand.u32 2147483647, %v924
      %vm1082 = vcmp.eq.f32.partialorder %v1081, 8.507059e+37
      %v1083 = vand.u32 %v924, 2147483648
      %v1084 = vor.u32 1.1754944e-38, %v1083
      %v1085 = vsel %vm1082, %v1084, %v1080
      %v1086 = vmul.f32 %v892, %v1085
      %v1087 = vrcp.pop %v926
      %v1088 = vmul.f32 %v926, %v1087
      %v1089 = vsub.f32 1.0, %v1088
      %v1090 = vmul.f32 %v1087, %v1089
      %v1091 = vadd.f32 %v1087, %v1090
      %vm1092 = vweird.f32 %v926
      %vm1093 = vweird.f32 %v1087
      %vm1094 = vmor %vm1092, %vm1093
      %v1095 = vsel %vm1094, %v1087, %v1091
      %v1096 = vand.u32 2147483647, %v926
      %vm1097 = vcmp.eq.f32.partialorder %v1096, 8.507059e+37
      %v1098 = vand.u32 %v926, 2147483648
      %v1099 = vor.u32 1.1754944e-38, %v1098
      %v1100 = vsel %vm1097, %v1099, %v1095
      %v1101 = vmul.f32 %v894, %v1100
      %v1102 = vrcp.pop %v928
      %v1103 = vmul.f32 %v928, %v1102
      %v1104 = vsub.f32 1.0, %v1103
      %v1105 = vmul.f32 %v1102, %v1104
      %v1106 = vadd.f32 %v1102, %v1105
      %vm1107 = vweird.f32 %v928
      %vm1108 = vweird.f32 %v1102
      %vm1109 = vmor %vm1107, %vm1108
      %v1110 = vsel %vm1109, %v1102, %v1106
      %v1111 = vand.u32 2147483647, %v928
      %vm1112 = vcmp.eq.f32.partialorder %v1111, 8.507059e+37
      %v1113 = vand.u32 %v928, 2147483648
      %v1114 = vor.u32 1.1754944e-38, %v1113
      %v1115 = vsel %vm1112, %v1114, %v1110
      %v1116 = vmul.f32 %v896, %v1115
      %v1117 = vrcp.pop %v930
      %v1118 = vmul.f32 %v930, %v1117
      %v1119 = vsub.f32 1.0, %v1118
      %v1120 = vmul.f32 %v1117, %v1119
      %v1121 = vadd.f32 %v1117, %v1120
      %vm1122 = vweird.f32 %v930
      %vm1123 = vweird.f32 %v1117
      %vm1124 = vmor %vm1122, %vm1123
      %v1125 = vsel %vm1124, %v1117, %v1121
      %v1126 = vand.u32 2147483647, %v930
      %vm1127 = vcmp.eq.f32.partialorder %v1126, 8.507059e+37
      %v1128 = vand.u32 %v930, 2147483648
      %v1129 = vor.u32 1.1754944e-38, %v1128
      %v1130 = vsel %vm1127, %v1129, %v1125
      %v1131 = vmul.f32 %v898, %v1130
      %v1132 = vrcp.pop %v932
      %v1133 = vmul.f32 %v932, %v1132
      %v1134 = vsub.f32 1.0, %v1133
      %v1135 = vmul.f32 %v1132, %v1134
      %v1136 = vadd.f32 %v1132, %v1135
      %vm1137 = vweird.f32 %v932
      %vm1138 = vweird.f32 %v1132
      %vm1139 = vmor %vm1137, %vm1138
      %v1140 = vsel %vm1139, %v1132, %v1136
      %v1141 = vand.u32 2147483647, %v932
      %vm1142 = vcmp.eq.f32.partialorder %v1141, 8.507059e+37
      %v1143 = vand.u32 %v932, 2147483648
      %v1144 = vor.u32 1.1754944e-38, %v1143
      %v1145 = vsel %vm1142, %v1144, %v1140
      %v1146 = vmul.f32 %v900, %v1145
      %v1147 = vrcp.pop %v934
      %v1148 = vmul.f32 %v934, %v1147
      %v1149 = vsub.f32 1.0, %v1148
      %v1150 = vmul.f32 %v1147, %v1149
      %v1151 = vadd.f32 %v1147, %v1150
      %vm1152 = vweird.f32 %v934
      %vm1153 = vweird.f32 %v1147
      %vm1154 = vmor %vm1152, %vm1153
      %v1155 = vsel %vm1154, %v1147, %v1151
      %v1156 = vand.u32 2147483647, %v934
      %vm1157 = vcmp.eq.f32.partialorder %v1156, 8.507059e+37
      %v1158 = vand.u32 %v934, 2147483648
      %v1159 = vor.u32 1.1754944e-38, %v1158
      %v1160 = vsel %vm1157, %v1159, %v1155
      %v1161 = vmul.f32 %v902, %v1160
      %v1162 = vrcp.pop %v936
      %v1163 = vmul.f32 %v936, %v1162
      %v1164 = vsub.f32 1.0, %v1163
      %v1165 = vmul.f32 %v1162, %v1164
      %v1166 = vadd.f32 %v1162, %v1165
      %vm1167 = vweird.f32 %v936
      %vm1168 = vweird.f32 %v1162
      %vm1169 = vmor %vm1167, %vm1168
      %v1170 = vsel %vm1169, %v1162, %v1166
      %v1171 = vand.u32 2147483647, %v936
      %vm1172 = vcmp.eq.f32.partialorder %v1171, 8.507059e+37
      %v1173 = vand.u32 %v936, 2147483648
      %v1174 = vor.u32 1.1754944e-38, %v1173
      %v1175 = vsel %vm1172, %v1174, %v1170
      %v1176 = vmul.f32 %v904, %v1175
      %1177 = vst [vmem:[%s175] sm:$0xff] %v951
      %1178 = vst [vmem:[%s175 + $0x8] sm:$0xff] %v966
      %1179 = vst [vmem:[%s175 + $0x10] sm:$0xff] %v981
      %1180 = vst [vmem:[%s175 + $0x18] sm:$0xff] %v996
      %1181 = vst [vmem:[%s175 + $0x20] sm:$0xff] %v1011
      %1182 = vst [vmem:[%s175 + $0x28] sm:$0xff] %v1026
      %1183 = vst [vmem:[%s175 + $0x30] sm:$0xff] %v1041
      %1184 = vst [vmem:[%s175 + $0x38] sm:$0xff] %v1056
      %1185 = vst [vmem:[%s175 + $0x40] sm:$0xff] %v1071
      %1186 = vst [vmem:[%s175 + $0x48] sm:$0xff] %v1086
      %1187 = vst [vmem:[%s175 + $0x50] sm:$0xff] %v1101
      %1188 = vst [vmem:[%s175 + $0x58] sm:$0xff] %v1116
      %1189 = vst [vmem:[%s175 + $0x60] sm:$0xff] %v1131
      %1190 = vst [vmem:[%s175 + $0x68] sm:$0xff] %v1146
      %1191 = vst [vmem:[%s175 + $0x70] sm:$0xff] %v1161
      %1192 = vst [vmem:[%s175 + $0x78] sm:$0xff] %v1176
      %s1193 = smul.u32 16, %s14
      %p1194 = scmp.lt.s32.totalorder %s1193, 31
      %s1195 = scalar_select %p1194, %s1193, 31
      %s1196 = smul.addr %s1195, 8
      %s1197 = scalar_lea.vmem %s3, %s1196
      // Predicated region
      $region33: #{mynet_forward.1} parent=31 // pred_check
        %p1198 = pneg %p100
      $region34: #{mynet_forward.1} parent=31 // pred_check_branch
        %1200 = sbr.rel (%p1198) target = $region36
      $region35: #{mynet_forward.1} parent=31 // pred_region
        %s1201 = smul.u32 16, %s14
      $region36: #{mynet_forward.1} parent=31 // pred_fallthru
        _
    $region32: #{mynet_forward.1} parent=5 // pred_fallthru
      _
    %p1202 = scmp.le.s32.totalorder 2, %s9
    // Predicated region
    $region37: #{mynet_forward.1} parent=5 // pred_check
      %p1203 = pneg %p1202
    $region38: #{mynet_forward.1} parent=5 // pred_check_branch
      %1205 = sbr.rel (%p1203) target = $region40
    $region39: #{mynet_forward.1} parent=5 // pred_region
      %s1206 = ssub.s32 %s9, 2
      // Predicated region
      $region41: #{mynet_forward.1} parent=39 // pred_check
        %p1207 = pneg %p106
      $region42: #{mynet_forward.1} parent=39 // pred_check_branch
        %1209 = sbr.rel (%p1207) target = $region44
      $region43: #{mynet_forward.1} parent=39 // pred_region
        %s1210 = smul.u32 16, %s15
        %p1211 = scmp.lt.s32.totalorder %s1210, 31
        %s1212 = scalar_select %p1211, %s1210, 31
        %s1213 = smul.addr %s1212, 8
        %s1214 = scalar_lea.vmem %s3, %s1213
      $region44: #{mynet_forward.1} parent=39 // pred_fallthru
        _
    $region40: #{mynet_forward.1} parent=5 // pred_fallthru
      _
  $region6: #{mynet_forward.1} parent=0 // loop_footer
    %s13 = sadd.s32 1, %s9
  $region7: #{mynet_forward.1} parent=0 // loop_footer_branch
    %8 = sbr.rel target = $region3
  $region8: #{mynet_forward.1} parent=0 // loop_exit
    _

</llo_original>
